<compile_context>
chip_gen: v5e
topology: v5e:2x2
jax: 0.10.0
libtpu: 0.0.40
codegen_flags: <defaults>
</compile_context>

<pallas_src>
import jax
import jax.numpy as jnp
from jax.experimental import pallas as pl
from jax.experimental.pallas import tpu as pltpu


def _round_up(x, m):
    return ((x + m - 1) // m) * m


def _fused_rotate_head_kernel(z_ref, w_ref, b_ref, out_ref):
    """Single fused step for one batch tile.

    z_ref  : (tb, L)        shared representation tile
    w_ref  : (L, n_pad)     fused, pre-transposed weights (W_t @ R_t stacked on lanes, padded)
    b_ref  : (1, n_pad)     stacked head biases (f32, zero padded)
    out_ref: (tb, n_pad)    all task predictions for this batch tile (lane-dense)
    """
    acc = jnp.dot(z_ref[...], w_ref[...], preferred_element_type=jnp.float32)  # MXU, f32 acc
    out_ref[...] = (acc + b_ref[...]).astype(out_ref.dtype)


def prepare_rotate_only_params(rotations, head_w, head_b, *, compute_dtype=jnp.bfloat16):
    """One-time (model-setup) fusion + layout of the per-task rotation / head weights.

    rotations : (T, L, L)   orthogonal rotation matrices
    head_w    : (T, O, L)   per-task linear-head weights (torch nn.Linear layout)
    head_b    : (T, O)      per-task biases
    Returns (w_pad, b_pad, T, O):
      w_pad : (L, n_pad)    lane-major fused weight, n_pad = round_up(T*O, 128), compute_dtype
      b_pad : (1, n_pad)    stacked biases, f32, zero padded
    """
    T, L, _ = rotations.shape
    O = head_w.shape[1]
    n = T * O
    n_pad = _round_up(n, 128)

    # fused[t] = W_t @ R_t ;  z @ fused[t].T == (z @ R_t.T) @ W_t.T  (rotate + head, one MXU pass)
    fused = jnp.einsum("tol,tlm->tom",
                       head_w.astype(jnp.float32),
                       rotations.astype(jnp.float32))                     # (T, O, L)
    # Lane-dense, transpose-free layout: w_flat[m, t*O + o] = fused[t, o, m]
    w_flat = jnp.transpose(fused, (2, 0, 1)).reshape(L, n)                 # (L, T*O)
    w_pad = jnp.pad(w_flat, ((0, 0), (0, n_pad - n))).astype(compute_dtype)
    b_pad = jnp.pad(head_b.reshape(1, n).astype(jnp.float32),
                    ((0, 0), (0, n_pad - n)))                              # (1, n_pad), f32
    return w_pad, b_pad, T, O


def _choose_block_b(B, compute_dtype):
    """Batch tile: sublane-aligned, >=2 even grid steps when possible (v7x dual-TC),
    512-row tiles for large (mem-bound) batches."""
    mult = 16 if jnp.dtype(compute_dtype) == jnp.dtype(jnp.bfloat16) else 8
    if B <= 2 * mult:
        return B                      # too small to split; full-dim block is always legal
    if B > 1024:
        return 512                    # big streaming tiles amortize the ~0.35us/step overhead
    half = _round_up(pl.cdiv(B, 2), mult)
    return half if half < B else B


def rotate_only_forward_fused(z, w_pad, b_pad, num_tasks, head_out, *,
                              block_b=None, out_dtype=jnp.float32,
                              output_layout="tbo"):
    """Per-call forward: stream z through the single fused rotate+head matmul.

    z        : (B, L)
    w_pad    : (L, n_pad)  precomputed by prepare_rotate_only_params (compute dtype)
    b_pad    : (1, n_pad)  precomputed biases (f32)
    returns  : (T, B, O) for output_layout="tbo" (matches stacked per-task preds),
               (B, T, O) for "bto", or (B, T*O) for "flat" (no extra layout pass).
    """
    B, L = z.shape
    n_pad = w_pad.shape[1]
    compute_dtype = w_pad.dtype

    if block_b is None:
        block_b = _choose_block_b(B, compute_dtype)
    grid = (pl.cdiv(B, block_b),)     # partial last block is masked by Pallas

    # VMEM budget: double-buffered streaming z/out tiles + single-buffered resident weight/bias.
    in_isz = jnp.dtype(compute_dtype).itemsize
    out_isz = jnp.dtype(out_dtype).itemsize
    vmem_bytes = (2 * block_b * L * in_isz
                  + 2 * block_b * n_pad * out_isz
                  + L * n_pad * in_isz
                  + n_pad * 4)
    vmem_limit = int(min(max(2 * vmem_bytes, 16 * 1024 * 1024), 64 * 1024 * 1024))

    out_pad = pl.pallas_call(
        _fused_rotate_head_kernel,
        out_shape=jax.ShapeDtypeStruct((B, n_pad), out_dtype),
        grid_spec=pltpu.PrefetchScalarGridSpec(
            num_scalar_prefetch=0,
            grid=grid,
            in_specs=[
                pl.BlockSpec((block_b, L), lambda i: (i, 0)),       # z tile: streams over batch
                pl.BlockSpec((L, n_pad), lambda i: (0, 0),          # fused weights: resident,
                             pipeline_mode=pl.Buffered(1)),         #   single-buffered
                pl.BlockSpec((1, n_pad), lambda i: (0, 0),          # biases: resident
                             pipeline_mode=pl.Buffered(1)),
            ],
            out_specs=pl.BlockSpec((block_b, n_pad), lambda i: (i, 0)),
        ),
        compiler_params=pltpu.CompilerParams(
            dimension_semantics=("parallel",),                      # megacore split on v7x
            vmem_limit_bytes=vmem_limit,
        ),
    )(z.astype(compute_dtype), w_pad, b_pad)

    out = out_pad[:, :num_tasks * head_out]                         # drop lane padding
    if output_layout == "flat":
        return out                                                  # (B, T*O)
    out = out.reshape(B, num_tasks, head_out)
    if output_layout == "bto":
        return out                                                  # (B, T, O)
    return jnp.transpose(out, (1, 0, 2))                            # (T, B, O)


def rotate_only_forward(z, rotations, head_w, head_b, *, compute_dtype=jnp.bfloat16,
                        block_b=None, out_dtype=jnp.float32, output_layout="tbo"):
    """Convenience wrapper (fuses params per call).  For repeated inference, call
    prepare_rotate_only_params once and reuse rotate_only_forward_fused."""
    w_pad, b_pad, T, O = prepare_rotate_only_params(
        rotations, head_w, head_b, compute_dtype=compute_dtype)
    return rotate_only_forward_fused(z, w_pad, b_pad, T, O, block_b=block_b,
                                     out_dtype=out_dtype, output_layout=output_layout)


def reference_forward(z, rotations, head_w, head_b):
    """Plain-JAX reference of the same forward semantics (f32 throughout)."""
    preds = []
    for i in range(rotations.shape[0]):
        z_i = jnp.einsum("ij,bj->bi", rotations[i], z)       # rotate()
        preds.append(z_i @ head_w[i].T + head_b[i])          # Linear head
    return jnp.stack(preds, axis=0)


if __name__ == "__main__":
    # Small, deterministic example shapes.
    B = 8            # batch
    D_IN = 64        # backbone input features
    LATENT = 32      # latent_size
    OUT = 16         # per-head output features
    NUM_TASKS = 3

    key = jax.random.PRNGKey(0)
    k_x, k_bb_w, k_bb_b, k_rot, k_hw, k_hb = jax.random.split(key, 6)

    # Input x and a simple linear backbone (glue: backbone is user-supplied in PyTorch).
    x = jax.random.normal(k_x, (B, D_IN), dtype=jnp.float32)
    bb_w = jax.random.normal(k_bb_w, (LATENT, D_IN), dtype=jnp.float32) * 0.05
    bb_b = jax.random.normal(k_bb_b, (LATENT,), dtype=jnp.float32) * 0.01
    z = x @ bb_w.T + bb_b                                    # rep = backbone(x), (B, LATENT)

    # Per-task orthogonal rotation matrices (deterministic: QR of seeded Gaussian).
    gauss = jax.random.normal(k_rot, (NUM_TASKS, LATENT, LATENT), dtype=jnp.float32)
    rotations = jnp.stack([jnp.linalg.qr(gauss[i])[0] for i in range(NUM_TASKS)], axis=0)

    # Per-task linear head parameters (torch nn.Linear layout).
    head_w = jax.random.normal(k_hw, (NUM_TASKS, OUT, LATENT), dtype=jnp.float32) * 0.1
    head_b = jax.random.normal(k_hb, (NUM_TASKS, OUT), dtype=jnp.float32) * 0.01

    ref = reference_forward(z, rotations, head_w, head_b)

    # f32 path: params fused once at "model setup", forward jitted; tight tolerance.
    w32, b32, T, O = prepare_rotate_only_params(
        rotations, head_w, head_b, compute_dtype=jnp.float32)
    fwd_f32 = jax.jit(lambda zz: rotate_only_forward_fused(zz, w32, b32, T, O))
    out_f32 = jax.block_until_ready(fwd_f32(z))
    assert out_f32.shape == (NUM_TASKS, B, OUT), out_f32.shape
    assert jnp.allclose(out_f32, ref, atol=1e-4, rtol=1e-4), \
        float(jnp.max(jnp.abs(out_f32 - ref)))

    # Default bf16 path (operands bf16, f32 accumulation): looser tolerance.
    out_bf16 = jax.block_until_ready(rotate_only_forward(z, rotations, head_w, head_b))
    assert out_bf16.shape == (NUM_TASKS, B, OUT), out_bf16.shape
    assert jnp.allclose(out_bf16, ref, atol=3e-2, rtol=3e-2), \
        float(jnp.max(jnp.abs(out_bf16 - ref)))

    print("KERNEL_OK")
</pallas_src>

<mosaic_0001>
module attributes {stable_mosaic.version = 11 : i64} {
  func.func @_fused_rotate_head_kernel(%arg0: i32, %arg1: memref<8x32xf32, #tpu.memory_space<vmem>>, %arg2: memref<32x128xf32, #tpu.memory_space<vmem>>, %arg3: memref<1x128xf32, #tpu.memory_space<vmem>>, %arg4: memref<8x128xf32, #tpu.memory_space<vmem>>) attributes {dimension_semantics = [#tpu.dimension_semantics<parallel>], iteration_bounds = array<i64: 1>, scalar_prefetch = 0 : i64, scratch_operands = 0 : i64, tpu.core_type = #tpu.core_type<tc>, window_params = [{transform_indices = @transform_0, window_bounds = array<i64: 8, 32>}, {pipeline_mode = #tpu.pipeline_mode<synchronous>, transform_indices = @transform_1, window_bounds = array<i64: 32, 128>}, {pipeline_mode = #tpu.pipeline_mode<synchronous>, transform_indices = @transform_2, window_bounds = array<i64: 1, 128>}, {transform_indices = @transform_3, window_bounds = array<i64: 8, 128>}]} {
    %c0 = arith.constant 0 : index
    %c0_0 = arith.constant 0 : index
    %0 = vector.load %arg1[%c0, %c0_0] : memref<8x32xf32, #tpu.memory_space<vmem>>, vector<8x32xf32>
    %c0_1 = arith.constant 0 : index
    %c0_2 = arith.constant 0 : index
    %1 = vector.load %arg2[%c0_1, %c0_2] : memref<32x128xf32, #tpu.memory_space<vmem>>, vector<32x128xf32>
    %cst = arith.constant dense<0.000000e+00> : vector<8x128xf32>
    %2 = tpu.matmul %0, %1, %cst {dimension_numbers = #tpu.dot_dimension_numbers<[1], [0], [0], [1], [0, 0, 1, 1], [], []>} : vector<8x32xf32>, vector<32x128xf32>, vector<8x128xf32> -> vector<8x128xf32>
    %c0_3 = arith.constant 0 : index
    %c0_4 = arith.constant 0 : index
    %3 = vector.load %arg3[%c0_3, %c0_4] : memref<1x128xf32, #tpu.memory_space<vmem>>, vector<1x128xf32>
    %4 = vector.broadcast %3 : vector<1x128xf32> to vector<8x128xf32>
    %5 = arith.addf %2, %4 : vector<8x128xf32>
    %c0_5 = arith.constant 0 : index
    %c0_6 = arith.constant 0 : index
    %6 = vector.load %arg4[%c0_5, %c0_6] : memref<8x128xf32, #tpu.memory_space<vmem>>, vector<8x128xf32>
    tpu.vector_store %arg4[%c0_5, %c0_6], %5 {strides = array<i32>} : memref<8x128xf32, #tpu.memory_space<vmem>>, vector<8x128xf32>,
    return
  }
  func.func @transform_0(%arg0: i32) -> (i32, i32) {
    %c0_i32 = arith.constant 0 : i32
    %c0_i32_0 = arith.constant 0 : i32
    return %arg0, %c0_i32 : i32, i32
  }
  func.func @transform_1(%arg0: i32) -> (i32, i32) {
    %c0_i32 = arith.constant 0 : i32
    %c0_i32_0 = arith.constant 0 : i32
    %c0_i32_1 = arith.constant 0 : i32
    return %c0_i32, %c0_i32_0 : i32, i32
  }
  func.func @transform_2(%arg0: i32) -> (i32, i32) {
    %c0_i32 = arith.constant 0 : i32
    %c0_i32_0 = arith.constant 0 : i32
    %c0_i32_1 = arith.constant 0 : i32
    return %c0_i32, %c0_i32_0 : i32, i32
  }
  func.func @transform_3(%arg0: i32) -> (i32, i32) {
    %c0_i32 = arith.constant 0 : i32
    %c0_i32_0 = arith.constant 0 : i32
    return %arg0, %c0_i32 : i32, i32
  }
}

</mosaic_0001>

<llo_original>
// kernel: _lambda_.1
$region0: #{_lambda_.1}
  #allocation0 [shape = 'u32[]', space=smem, size = 0x4, offset = 0x4, fixed_abs, tag = 'smem constant byte address 0x4 - core index']
  #allocation1 [shape = 'u32[72,128]{1,0:T(1,128)}', space=vmem, size = 0x9000, scoped, tag = 'internal scratch']
  %s0 = inlined_call_operand.hbm [shape: f32[8,32], index: 0, kind: input, shape index: {}]
  %s1 = inlined_call_operand.hbm [shape: f32[32,128], index: 1, kind: input, shape index: {}]
  %s2 = inlined_call_operand.vmem [shape: f32[1,128], index: 2, kind: input, shape index: {}]
  %s3 = inlined_call_operand.vmem [shape: f32[8,128], index: 3, kind: output, shape index: {}]
  %s4 = sld [smem:[#allocation0]]
  $region30: #{_lambda_.1} parent=0
    _
  %s6 = ssub.s32 1, %s4
  %s7 = scalar_select 0, %s6, %s4
  $region1: #{_lambda_.1} parent=0
    #allocation2 [shape = 'u8[4096]{0}', space=vmem, size = 0x1000, scoped, tag = 'input window, operand 0, single buffered']
    #allocation3 [shape = 's32[1]{0}', space=sflag, size = 0x4, scoped, tag = 'scoped memory for _lambda_.1']
    #allocation4 [shape = 'u8[16384]{0}', space=vmem, size = 0x4000, scoped, tag = 'input window, operand 1, single buffered']
    #allocation5 [shape = 's32[1]{0}', space=sflag, size = 0x4, scoped, tag = 'scoped memory for _lambda_.1']
    %8 = vsyncpa [#allocation3], 0
    %9 = vsyncpa [#allocation5], 0
    // Predicated region
    $region2: #{_lambda_.1} parent=1 // pred_check
      _
    $region3: #{_lambda_.1} parent=1 // pred_check_branch
      %11 = sbr.rel (0) target = $region5
    $region4: #{_lambda_.1} parent=1 // pred_region
      %13 = vsyncadd [#allocation3], 0
      %s15 = sshll.u32 %s0, 4
      %s16 = int_to_ptr.hbm [resolvable:$true] %s15
      %s17 = sshll.u32 [#allocation2], 4
      %s18 = int_to_ptr.vmem [resolvable:$true] %s17
      %20 = dma.hbm_to_vmem [thread:$0]  %s16, 128, %s18, [#allocation3]
    $region5: #{_lambda_.1} parent=1 // pred_fallthru
      _
    // Predicated region
    $region6: #{_lambda_.1} parent=1 // pred_check
      _
    $region7: #{_lambda_.1} parent=1 // pred_check_branch
      %22 = sbr.rel (0) target = $region9
    $region8: #{_lambda_.1} parent=1 // pred_region
      %24 = vsyncadd [#allocation5], 0
      %s25 = sshll.u32 %s1, 4
      %s26 = int_to_ptr.hbm [resolvable:$true] %s25
      %s27 = sshll.u32 [#allocation4], 4
      %s28 = int_to_ptr.vmem [resolvable:$true] %s27
      %33 = dma.hbm_to_vmem [thread:$0]  %s26, 512, %s28, [#allocation5], 128, 128, 8
    $region9: #{_lambda_.1} parent=1 // pred_fallthru
      _
    // Predicated region
    $region10: #{_lambda_.1} parent=1 // pred_check
      _
    $region11: #{_lambda_.1} parent=1 // pred_check_branch
      %35 = sbr.rel (0) target = $region13
    $region12: #{_lambda_.1} parent=1 // pred_region
      _
    $region13: #{_lambda_.1} parent=1 // pred_fallthru
      _
    // Predicated region
    $region14: #{_lambda_.1} parent=1 // pred_check
      _
    $region15: #{_lambda_.1} parent=1 // pred_check_branch
      %37 = sbr.rel (0) target = $region17
    $region16: #{_lambda_.1} parent=1 // pred_region
      %39 = dma.done [#allocation3], 128
    $region17: #{_lambda_.1} parent=1 // pred_fallthru
      _
    // Predicated region
    $region18: #{_lambda_.1} parent=1 // pred_check
      _
    $region19: #{_lambda_.1} parent=1 // pred_check_branch
      %41 = sbr.rel (0) target = $region21
    $region20: #{_lambda_.1} parent=1 // pred_region
      %43 = dma.done [#allocation5], 512
    $region21: #{_lambda_.1} parent=1 // pred_fallthru
      _
    %v44 = vld [vmem:[#allocation2] sm:$0xff]
    %v45 = vld [vmem:[#allocation4] sm:$0xff]
    %v46 = vld [vmem:[#allocation4 + $0x8] sm:$0xff]
    %v47 = vld [vmem:[#allocation4 + $0x10] sm:$0xff]
    %v48 = vld [vmem:[#allocation4 + $0x18] sm:$0xff]
    %v49 = vld [vmem:[%s2] sm:$0x1]
    %v51 = vperm.slane %v49, 0
    %vm53 = vcmask 261120
    %v55 = vsel %vm53, %v44, 0
    %57 = vmatpush.msra.mxu0 0.0
    %58 = vmatpush.msra.mxu0 0.0
    %59 = vmatpush.msra.mxu0 0.0
    %60 = vmatpush.msra.mxu0 0.0
    %61 = vmatpush.msra.mxu0 0.0
    %62 = vmatpush.msra.mxu0 0.0
    %63 = vmatpush.msra.mxu0 0.0
    %64 = vmatpush.msra.mxu0 0.0
    %65 = vmatpush.msra.mxu0 0.0
    %66 = vmatpush.msra.mxu0 0.0
    %67 = vmatpush.msra.mxu0 0.0
    %68 = vmatpush.msra.mxu0 0.0
    %69 = vmatpush.msra.mxu0 %v48
    %70 = vmatpush.msra.mxu0 %v47
    %71 = vmatpush.msra.mxu0 %v46
    %72 = vmatpush.msra.mxu0 %v45
    %73 = vmatmul.f32.gmra.mxu0 %v55
    %v74 = vpop.f32.mrf.mxu0
    %v75 = vadd.f32 %v51, %v74
    %76 = vdwg.mxu0
    %77 = vst [vmem:[%s3] sm:$0xff] %v75
    // Predicated region
    $region22: #{_lambda_.1} parent=1 // pred_check
      _
    $region23: #{_lambda_.1} parent=1 // pred_check_branch
      %79 = sbr.rel (0) target = $region25
    $region24: #{_lambda_.1} parent=1 // pred_region
      _
    $region25: #{_lambda_.1} parent=1 // pred_fallthru
      _
    // Predicated region
    $region26: #{_lambda_.1} parent=1 // pred_check
      _
    $region27: #{_lambda_.1} parent=1 // pred_check_branch
      %81 = sbr.rel (0) target = $region29
    $region28: #{_lambda_.1} parent=1 // pred_region
      _
    $region29: #{_lambda_.1} parent=1 // pred_fallthru
      _
    %82 = vsyncpa [#allocation3], 1
    %83 = vsyncpa [#allocation5], 1

</llo_original>
